<compile_context>
chip_gen: v7x
topology: tpu7x:2x2x1
jax: 0.10.0
libtpu: 0.0.40
codegen_flags: <defaults>
</compile_context>

<pallas_src>
import functools
import math

import jax
import jax.numpy as jnp
from jax import lax
from jax.experimental import pallas as pl
from jax.experimental.pallas import tpu as pltpu


# ---------------------------------------------------------------------------
# In-kernel compute
# ---------------------------------------------------------------------------
def _rolled_mac(x, planes_ref, shifts, axis, n_acc=3):
    """sum_t roll(x, shifts[t], axis) * planes_ref[t] with `n_acc` independent
    partial accumulators (round-robin) and a tree sum, so the VPU adds expose
    ILP and can co-issue with the XLU rolls."""
    n_acc = min(n_acc, len(shifts))
    parts = [None] * n_acc
    for t, s in enumerate(shifts):
        tap = x if s == 0 else pltpu.roll(x, shift=s, axis=axis)
        term = tap * planes_ref[t]          # plane already contains weight*mask
        a = t % n_acc
        parts[a] = term if parts[a] is None else parts[a] + term
    while len(parts) > 1:
        nxt = [parts[i] + parts[i + 1] for i in range(0, len(parts) - 1, 2)]
        if len(parts) % 2:
            nxt.append(parts[-1])
        parts = nxt
    return parts[0]


def _ds_conv(x, dwp_ref, bd_ref, pwp_ref, bp_ref, dw_shifts, pw_shifts):
    """DepthwiseSeparableConv forward on a (rows, HW) block:
    depthwise 3x3 pad=1 -> ReLU -> pointwise 1x1 -> ReLU."""
    h = _rolled_mac(x, dwp_ref, dw_shifts, axis=1)    # lane rolls (spatial taps)
    h = jnp.maximum(h + bd_ref[...], 0.0)
    # TODO(synk): if C ever grows to >=64, do the 1x1 on the MXU as
    # (rows_per_image*HW, Cin) x (Cin, Cout) instead of sublane rolls.
    y = _rolled_mac(h, pwp_ref, pw_shifts, axis=0)    # sublane rolls (channel mix)
    return jnp.maximum(y + bp_ref[...], 0.0)


def _residual_block_kernel(dw_shifts, pw_shifts,
                           x_ref,
                           dwp1_ref, bd1_ref, pwp1_ref, bp1_ref,
                           dwp2_ref, bd2_ref, pwp2_ref, bp2_ref,
                           o_ref):
    x = x_ref[...]                                    # (rows, HW), lane/sublane dense
    h = _ds_conv(x, dwp1_ref, bd1_ref, pwp1_ref, bp1_ref, dw_shifts, pw_shifts)
    h = _ds_conv(h, dwp2_ref, bd2_ref, pwp2_ref, bp2_ref, dw_shifts, pw_shifts)
    o_ref[...] = jnp.maximum(h + x, 0.0)              # residual add + ReLU, unmasked store


# ---------------------------------------------------------------------------
# Host-side precomputation (weight*mask planes, replicated biases)
# ---------------------------------------------------------------------------
def _depthwise_planes(wd, H, W, reps):
    """wd: (3,3,C).  Returns (shifts, planes) with planes[t]: (reps*C, H*W) equal
    to weight*validity for tap t.  Zero padding and roll wrap-around are both
    handled by exact zeros baked into the plane (bit-identical to a select)."""
    _, _, C = wd.shape
    HW = H * W
    s = jnp.arange(HW)
    row, col = s // W, s % W
    shifts, planes = [], []
    for kh in range(3):
        for kw in range(3):
            oh, ow = kh - 1, kw - 1
            shifts.append((-(oh * W + ow)) % HW)      # rolled[s] = x[s + oh*W + ow]
            valid = ((row + oh >= 0) & (row + oh < H) &
                     (col + ow >= 0) & (col + ow < W)).astype(jnp.float32)
            plane = wd[kh, kw, :][:, None] * valid[None, :]     # (C, HW)
            planes.append(jnp.tile(plane, (reps, 1)))           # (reps*C, HW)
    return tuple(shifts), jnp.stack(planes, 0)


def _pointwise_planes(wp, reps, HW):
    """wp: (Cin, Cout) with Cin == Cout == C.  Pointwise 1x1 as 2C-1 sublane
    rolls: rolled_d[r] = acc[r + d] which, for output row r (channel co = r%C),
    is input channel co+d of the SAME image whenever 0 <= co+d < C; rows where
    the roll would cross an image boundary get an exact 0 weight."""
    C = wp.shape[0]
    rows = reps * C
    co = jnp.arange(rows) % C
    shifts, planes = [], []
    for d in range(-(C - 1), C):
        shifts.append((-d) % rows)
        ci = co + d
        w_r = jnp.where((ci >= 0) & (ci < C),
                        wp[jnp.clip(ci, 0, C - 1), co], 0.0)    # (rows,)
        planes.append(jnp.broadcast_to(w_r[:, None], (rows, HW)))
    return tuple(shifts), jnp.stack(planes, 0)


def _replicate_bias(b, C, reps, HW):
    return jnp.tile(b.reshape(C, 1), (reps, HW)).astype(jnp.float32)


def _choose_batch_tile(N, C, HW, itemsize=4):
    """Pick batch_tile so rows = bt*C is a multiple of 8 (full-sublane vregs),
    the x/out block stays <=~2 MiB, rows <= 128 (keeps the resident weight
    planes small inside default scoped VMEM on v5e/v6e/v7x), and -- when N
    allows -- the grid has >= 8 steps so the DMA pipeline reaches steady state."""
    unit = 8 // math.gcd(C, 8)
    cap = max(unit, min((2 << 20) // max(1, C * HW * itemsize),
                        128 // max(1, C)))
    cap = max(unit, (cap // unit) * unit)
    bt = unit
    while bt * 2 <= cap and -(-N // (bt * 2)) >= 8:
        bt *= 2
    return bt


# ---------------------------------------------------------------------------
# Wrapper
# ---------------------------------------------------------------------------
def residual_block(x_nchw, params, *, batch_tile=None):
    """x_nchw: (N, C, H, W) float32.  params = (wd1 (3,3,C), bd1 (1,C),
    wp1 (Cin,Cout), bp1 (1,Cout), wd2, bd2, wp2, bp2) -- same parameterization
    as the PyTorch ResidualBlock(use_depthwise=True).  Returns (N, C, H, W)."""
    wd1, bd1, wp1, bp1, wd2, bd2, wp2, bp2 = params
    N, C, H, W = x_nchw.shape
    HW = H * W
    assert wp1.shape == (C, C) and wp2.shape == (C, C), "residual add needs in_ch == out_ch"
    assert HW % 128 == 0, "H*W must be a multiple of 128 for the lane-dense layout"

    unit = 8 // math.gcd(C, 8)
    if batch_tile is None:
        batch_tile = _choose_batch_tile(N, C, HW)
    batch_tile = max(unit, -(-batch_tile // unit) * unit)   # rows % 8 == 0
    n_pad = -(-N // batch_tile) * batch_tile                # pad batch, don't assert
    grid = (n_pad // batch_tile,)
    rows = batch_tile * C

    x = x_nchw.astype(jnp.float32)
    if n_pad != N:
        x = jnp.concatenate([x, jnp.zeros((n_pad - N, C, H, W), jnp.float32)], 0)
    x2d = x.reshape(n_pad * C, HW)                          # contiguous, lane-dense view

    dw_shifts, dwp1 = _depthwise_planes(wd1, H, W, batch_tile)
    _,         dwp2 = _depthwise_planes(wd2, H, W, batch_tile)
    pw_shifts, pwp1 = _pointwise_planes(wp1, batch_tile, HW)
    _,         pwp2 = _pointwise_planes(wp2, batch_tile, HW)
    consts = (dwp1, _replicate_bias(bd1, C, batch_tile, HW),
              pwp1, _replicate_bias(bp1, C, batch_tile, HW),
              dwp2, _replicate_bias(bd2, C, batch_tile, HW),
              pwp2, _replicate_bias(bp2, C, batch_tile, HW))

    def const_spec(a):
        return pl.BlockSpec(a.shape, lambda b, _nd=a.ndim: (0,) * _nd)

    out2d = pl.pallas_call(
        functools.partial(_residual_block_kernel, dw_shifts, pw_shifts),
        out_shape=jax.ShapeDtypeStruct((n_pad * C, HW), jnp.float32),
        grid_spec=pltpu.PrefetchScalarGridSpec(
            num_scalar_prefetch=0,
            grid=grid,
            in_specs=[pl.BlockSpec((rows, HW), lambda b: (b, 0))]
                     + [const_spec(a) for a in consts],
            out_specs=pl.BlockSpec((rows, HW), lambda b: (b, 0)),
        ),
        # Batch-tile steps are independent -> parallel (2x on v7x megacore,
        # harmless on single-TC v5e/v6e).  Per-step VMEM stays well under the
        # default scoped limits (rows <= 128), so no vmem_limit override.
        compiler_params=pltpu.CompilerParams(
            dimension_semantics=("parallel",)),
    )(x2d, *consts)

    return out2d.reshape(n_pad, C, H, W)[:N]


# ---------------------------------------------------------------------------
# Pure-JAX reference (mirrors the PyTorch forward exactly)
# ---------------------------------------------------------------------------
def ref_residual_block(x_nchw, params):
    wd1, bd1, wp1, bp1, wd2, bd2, wp2, bp2 = params

    def dsconv(x, wd, bd, wp, bp):
        C = x.shape[1]
        k_dw = jnp.transpose(wd, (2, 0, 1))[:, None, :, :]   # (C,1,3,3) OIHW
        y = lax.conv_general_dilated(
            x, k_dw, (1, 1), ((1, 1), (1, 1)),
            feature_group_count=C,
            dimension_numbers=("NCHW", "OIHW", "NCHW"))
        y = jnp.maximum(y + bd.reshape(1, -1, 1, 1), 0.0)
        k_pw = jnp.transpose(wp, (1, 0))[:, :, None, None]   # (Cout,Cin,1,1)
        y = lax.conv_general_dilated(
            y, k_pw, (1, 1), ((0, 0), (0, 0)),
            dimension_numbers=("NCHW", "OIHW", "NCHW"))
        y = jnp.maximum(y + bp.reshape(1, -1, 1, 1), 0.0)
        return y

    h = dsconv(x_nchw, wd1, bd1, wp1, bp1)
    h = dsconv(h, wd2, bd2, wp2, bp2)
    return jnp.maximum(h + x_nchw, 0.0)


# ---------------------------------------------------------------------------
# Main
# ---------------------------------------------------------------------------
if __name__ == "__main__":
    N, C, H, W = 2, 4, 16, 16                                # in_channels == out_channels
    key = jax.random.PRNGKey(0)
    keys = jax.random.split(key, 3)

    x = jax.random.normal(keys[0], (N, C, H, W), jnp.float32)

    def make_ds_params(k):
        k1, k2, k3, k4 = jax.random.split(k, 4)
        wd = 0.2 * jax.random.normal(k1, (3, 3, C), jnp.float32)   # depthwise (kH,kW,C)
        bd = 0.1 * jax.random.normal(k2, (1, C), jnp.float32)      # depthwise bias
        wp = 0.2 * jax.random.normal(k3, (C, C), jnp.float32)      # pointwise (Cin,Cout)
        bp = 0.1 * jax.random.normal(k4, (1, C), jnp.float32)      # pointwise bias
        return wd, bd, wp, bp

    params = make_ds_params(keys[1]) + make_ds_params(keys[2])

    out = jax.block_until_ready(residual_block(x, params))
    ref = jax.block_until_ready(ref_residual_block(x, params))

    assert out.shape == (N, C, H, W)
    assert jnp.allclose(out, ref, rtol=1e-4, atol=1e-4), "mismatch vs reference"
    print("KERNEL_OK")
</pallas_src>

<mosaic_0001>
module attributes {stable_mosaic.version = 11 : i64} {
  func.func @_residual_block_kernel(%arg0: i32, %arg1: memref<8x256xf32, #tpu.memory_space<vmem>>, %arg2: memref<9x8x256xf32, #tpu.memory_space<vmem>>, %arg3: memref<8x256xf32, #tpu.memory_space<vmem>>, %arg4: memref<7x8x256xf32, #tpu.memory_space<vmem>>, %arg5: memref<8x256xf32, #tpu.memory_space<vmem>>, %arg6: memref<9x8x256xf32, #tpu.memory_space<vmem>>, %arg7: memref<8x256xf32, #tpu.memory_space<vmem>>, %arg8: memref<7x8x256xf32, #tpu.memory_space<vmem>>, %arg9: memref<8x256xf32, #tpu.memory_space<vmem>>, %arg10: memref<8x256xf32, #tpu.memory_space<vmem>>) attributes {dimension_semantics = [#tpu.dimension_semantics<parallel>], iteration_bounds = array<i64: 1>, scalar_prefetch = 0 : i64, scratch_operands = 0 : i64, tpu.core_type = #tpu.core_type<tc>, window_params = [{transform_indices = @transform_0, window_bounds = array<i64: 8, 256>}, {pipeline_mode = #tpu.pipeline_mode<synchronous>, transform_indices = @transform_1, window_bounds = array<i64: 9, 8, 256>}, {pipeline_mode = #tpu.pipeline_mode<synchronous>, transform_indices = @transform_2, window_bounds = array<i64: 8, 256>}, {pipeline_mode = #tpu.pipeline_mode<synchronous>, transform_indices = @transform_3, window_bounds = array<i64: 7, 8, 256>}, {pipeline_mode = #tpu.pipeline_mode<synchronous>, transform_indices = @transform_4, window_bounds = array<i64: 8, 256>}, {pipeline_mode = #tpu.pipeline_mode<synchronous>, transform_indices = @transform_5, window_bounds = array<i64: 9, 8, 256>}, {pipeline_mode = #tpu.pipeline_mode<synchronous>, transform_indices = @transform_6, window_bounds = array<i64: 8, 256>}, {pipeline_mode = #tpu.pipeline_mode<synchronous>, transform_indices = @transform_7, window_bounds = array<i64: 7, 8, 256>}, {pipeline_mode = #tpu.pipeline_mode<synchronous>, transform_indices = @transform_8, window_bounds = array<i64: 8, 256>}, {transform_indices = @transform_9, window_bounds = array<i64: 8, 256>}]} {
    %c0 = arith.constant 0 : index
    %c0_0 = arith.constant 0 : index
    %0 = vector.load %arg1[%c0, %c0_0] : memref<8x256xf32, #tpu.memory_space<vmem>>, vector<8x256xf32>
    %c17_i32 = arith.constant 17 : i32
    %1 = tpu.dynamic_rotate %0 by %c17_i32 dim 1 : vector<8x256xf32>, i32 -> vector<8x256xf32>
    %c0_1 = arith.constant 0 : index
    %c0_2 = arith.constant 0 : index
    %c0_3 = arith.constant 0 : index
    %2 = vector.load %arg2[%c0_1, %c0_2, %c0_3] : memref<9x8x256xf32, #tpu.memory_space<vmem>>, vector<1x8x256xf32>
    %3 = vector.shape_cast %2 : vector<1x8x256xf32> to vector<8x256xf32>
    %4 = arith.mulf %1, %3 : vector<8x256xf32>
    %c16_i32 = arith.constant 16 : i32
    %5 = tpu.dynamic_rotate %0 by %c16_i32 dim 1 : vector<8x256xf32>, i32 -> vector<8x256xf32>
    %c1 = arith.constant 1 : index
    %c0_4 = arith.constant 0 : index
    %c0_5 = arith.constant 0 : index
    %6 = vector.load %arg2[%c1, %c0_4, %c0_5] : memref<9x8x256xf32, #tpu.memory_space<vmem>>, vector<1x8x256xf32>
    %7 = vector.shape_cast %6 : vector<1x8x256xf32> to vector<8x256xf32>
    %8 = arith.mulf %5, %7 : vector<8x256xf32>
    %c15_i32 = arith.constant 15 : i32
    %9 = tpu.dynamic_rotate %0 by %c15_i32 dim 1 : vector<8x256xf32>, i32 -> vector<8x256xf32>
    %c2 = arith.constant 2 : index
    %c0_6 = arith.constant 0 : index
    %c0_7 = arith.constant 0 : index
    %10 = vector.load %arg2[%c2, %c0_6, %c0_7] : memref<9x8x256xf32, #tpu.memory_space<vmem>>, vector<1x8x256xf32>
    %11 = vector.shape_cast %10 : vector<1x8x256xf32> to vector<8x256xf32>
    %12 = arith.mulf %9, %11 : vector<8x256xf32>
    %c1_i32 = arith.constant 1 : i32
    %13 = tpu.dynamic_rotate %0 by %c1_i32 dim 1 : vector<8x256xf32>, i32 -> vector<8x256xf32>
    %c3 = arith.constant 3 : index
    %c0_8 = arith.constant 0 : index
    %c0_9 = arith.constant 0 : index
    %14 = vector.load %arg2[%c3, %c0_8, %c0_9] : memref<9x8x256xf32, #tpu.memory_space<vmem>>, vector<1x8x256xf32>
    %15 = vector.shape_cast %14 : vector<1x8x256xf32> to vector<8x256xf32>
    %16 = arith.mulf %13, %15 : vector<8x256xf32>
    %17 = arith.addf %4, %16 : vector<8x256xf32>
    %c4 = arith.constant 4 : index
    %c0_10 = arith.constant 0 : index
    %c0_11 = arith.constant 0 : index
    %18 = vector.load %arg2[%c4, %c0_10, %c0_11] : memref<9x8x256xf32, #tpu.memory_space<vmem>>, vector<1x8x256xf32>
    %19 = vector.shape_cast %18 : vector<1x8x256xf32> to vector<8x256xf32>
    %20 = arith.mulf %0, %19 : vector<8x256xf32>
    %21 = arith.addf %8, %20 : vector<8x256xf32>
    %c255_i32 = arith.constant 255 : i32
    %22 = tpu.dynamic_rotate %0 by %c255_i32 dim 1 : vector<8x256xf32>, i32 -> vector<8x256xf32>
    %c5 = arith.constant 5 : index
    %c0_12 = arith.constant 0 : index
    %c0_13 = arith.constant 0 : index
    %23 = vector.load %arg2[%c5, %c0_12, %c0_13] : memref<9x8x256xf32, #tpu.memory_space<vmem>>, vector<1x8x256xf32>
    %24 = vector.shape_cast %23 : vector<1x8x256xf32> to vector<8x256xf32>
    %25 = arith.mulf %22, %24 : vector<8x256xf32>
    %26 = arith.addf %12, %25 : vector<8x256xf32>
    %c241_i32 = arith.constant 241 : i32
    %27 = tpu.dynamic_rotate %0 by %c241_i32 dim 1 : vector<8x256xf32>, i32 -> vector<8x256xf32>
    %c6 = arith.constant 6 : index
    %c0_14 = arith.constant 0 : index
    %c0_15 = arith.constant 0 : index
    %28 = vector.load %arg2[%c6, %c0_14, %c0_15] : memref<9x8x256xf32, #tpu.memory_space<vmem>>, vector<1x8x256xf32>
    %29 = vector.shape_cast %28 : vector<1x8x256xf32> to vector<8x256xf32>
    %30 = arith.mulf %27, %29 : vector<8x256xf32>
    %31 = arith.addf %17, %30 : vector<8x256xf32>
    %c240_i32 = arith.constant 240 : i32
    %32 = tpu.dynamic_rotate %0 by %c240_i32 dim 1 : vector<8x256xf32>, i32 -> vector<8x256xf32>
    %c7 = arith.constant 7 : index
    %c0_16 = arith.constant 0 : index
    %c0_17 = arith.constant 0 : index
    %33 = vector.load %arg2[%c7, %c0_16, %c0_17] : memref<9x8x256xf32, #tpu.memory_space<vmem>>, vector<1x8x256xf32>
    %34 = vector.shape_cast %33 : vector<1x8x256xf32> to vector<8x256xf32>
    %35 = arith.mulf %32, %34 : vector<8x256xf32>
    %36 = arith.addf %21, %35 : vector<8x256xf32>
    %c239_i32 = arith.constant 239 : i32
    %37 = tpu.dynamic_rotate %0 by %c239_i32 dim 1 : vector<8x256xf32>, i32 -> vector<8x256xf32>
    %c8 = arith.constant 8 : index
    %c0_18 = arith.constant 0 : index
    %c0_19 = arith.constant 0 : index
    %38 = vector.load %arg2[%c8, %c0_18, %c0_19] : memref<9x8x256xf32, #tpu.memory_space<vmem>>, vector<1x8x256xf32>
    %39 = vector.shape_cast %38 : vector<1x8x256xf32> to vector<8x256xf32>
    %40 = arith.mulf %37, %39 : vector<8x256xf32>
    %41 = arith.addf %26, %40 : vector<8x256xf32>
    %42 = arith.addf %31, %36 : vector<8x256xf32>
    %43 = arith.addf %42, %41 : vector<8x256xf32>
    %c0_20 = arith.constant 0 : index
    %c0_21 = arith.constant 0 : index
    %44 = vector.load %arg3[%c0_20, %c0_21] : memref<8x256xf32, #tpu.memory_space<vmem>>, vector<8x256xf32>
    %45 = arith.addf %43, %44 : vector<8x256xf32>
    %cst = arith.constant 0.000000e+00 : f32
    %46 = vector.broadcast %cst : f32 to vector<8x256xf32>
    %47 = arith.maximumf %45, %46 : vector<8x256xf32>
    %c3_i32 = arith.constant 3 : i32
    %48 = tpu.dynamic_rotate %47 by %c3_i32 dim 0 : vector<8x256xf32>, i32 -> vector<8x256xf32>
    %c0_22 = arith.constant 0 : index
    %c0_23 = arith.constant 0 : index
    %c0_24 = arith.constant 0 : index
    %49 = vector.load %arg4[%c0_22, %c0_23, %c0_24] : memref<7x8x256xf32, #tpu.memory_space<vmem>>, vector<1x8x256xf32>
    %50 = vector.shape_cast %49 : vector<1x8x256xf32> to vector<8x256xf32>
    %51 = arith.mulf %48, %50 : vector<8x256xf32>
    %c2_i32 = arith.constant 2 : i32
    %52 = tpu.dynamic_rotate %47 by %c2_i32 dim 0 : vector<8x256xf32>, i32 -> vector<8x256xf32>
    %c1_25 = arith.constant 1 : index
    %c0_26 = arith.constant 0 : index
    %c0_27 = arith.constant 0 : index
    %53 = vector.load %arg4[%c1_25, %c0_26, %c0_27] : memref<7x8x256xf32, #tpu.memory_space<vmem>>, vector<1x8x256xf32>
    %54 = vector.shape_cast %53 : vector<1x8x256xf32> to vector<8x256xf32>
    %55 = arith.mulf %52, %54 : vector<8x256xf32>
    %c1_i32_28 = arith.constant 1 : i32
    %56 = tpu.dynamic_rotate %47 by %c1_i32_28 dim 0 : vector<8x256xf32>, i32 -> vector<8x256xf32>
    %c2_29 = arith.constant 2 : index
    %c0_30 = arith.constant 0 : index
    %c0_31 = arith.constant 0 : index
    %57 = vector.load %arg4[%c2_29, %c0_30, %c0_31] : memref<7x8x256xf32, #tpu.memory_space<vmem>>, vector<1x8x256xf32>
    %58 = vector.shape_cast %57 : vector<1x8x256xf32> to vector<8x256xf32>
    %59 = arith.mulf %56, %58 : vector<8x256xf32>
    %c3_32 = arith.constant 3 : index
    %c0_33 = arith.constant 0 : index
    %c0_34 = arith.constant 0 : index
    %60 = vector.load %arg4[%c3_32, %c0_33, %c0_34] : memref<7x8x256xf32, #tpu.memory_space<vmem>>, vector<1x8x256xf32>
    %61 = vector.shape_cast %60 : vector<1x8x256xf32> to vector<8x256xf32>
    %62 = arith.mulf %47, %61 : vector<8x256xf32>
    %63 = arith.addf %51, %62 : vector<8x256xf32>
    %c7_i32 = arith.constant 7 : i32
    %64 = tpu.dynamic_rotate %47 by %c7_i32 dim 0 : vector<8x256xf32>, i32 -> vector<8x256xf32>
    %c4_35 = arith.constant 4 : index
    %c0_36 = arith.constant 0 : index
    %c0_37 = arith.constant 0 : index
    %65 = vector.load %arg4[%c4_35, %c0_36, %c0_37] : memref<7x8x256xf32, #tpu.memory_space<vmem>>, vector<1x8x256xf32>
    %66 = vector.shape_cast %65 : vector<1x8x256xf32> to vector<8x256xf32>
    %67 = arith.mulf %64, %66 : vector<8x256xf32>
    %68 = arith.addf %55, %67 : vector<8x256xf32>
    %c6_i32 = arith.constant 6 : i32
    %69 = tpu.dynamic_rotate %47 by %c6_i32 dim 0 : vector<8x256xf32>, i32 -> vector<8x256xf32>
    %c5_38 = arith.constant 5 : index
    %c0_39 = arith.constant 0 : index
    %c0_40 = arith.constant 0 : index
    %70 = vector.load %arg4[%c5_38, %c0_39, %c0_40] : memref<7x8x256xf32, #tpu.memory_space<vmem>>, vector<1x8x256xf32>
    %71 = vector.shape_cast %70 : vector<1x8x256xf32> to vector<8x256xf32>
    %72 = arith.mulf %69, %71 : vector<8x256xf32>
    %73 = arith.addf %59, %72 : vector<8x256xf32>
    %c5_i32 = arith.constant 5 : i32
    %74 = tpu.dynamic_rotate %47 by %c5_i32 dim 0 : vector<8x256xf32>, i32 -> vector<8x256xf32>
    %c6_41 = arith.constant 6 : index
    %c0_42 = arith.constant 0 : index
    %c0_43 = arith.constant 0 : index
    %75 = vector.load %arg4[%c6_41, %c0_42, %c0_43] : memref<7x8x256xf32, #tpu.memory_space<vmem>>, vector<1x8x256xf32>
    %76 = vector.shape_cast %75 : vector<1x8x256xf32> to vector<8x256xf32>
    %77 = arith.mulf %74, %76 : vector<8x256xf32>
    %78 = arith.addf %63, %77 : vector<8x256xf32>
    %79 = arith.addf %78, %68 : vector<8x256xf32>
    %80 = arith.addf %79, %73 : vector<8x256xf32>
    %c0_44 = arith.constant 0 : index
    %c0_45 = arith.constant 0 : index
    %81 = vector.load %arg5[%c0_44, %c0_45] : memref<8x256xf32, #tpu.memory_space<vmem>>, vector<8x256xf32>
    %82 = arith.addf %80, %81 : vector<8x256xf32>
    %cst_46 = arith.constant 0.000000e+00 : f32
    %83 = vector.broadcast %cst_46 : f32 to vector<8x256xf32>
    %84 = arith.maximumf %82, %83 : vector<8x256xf32>
    %c17_i32_47 = arith.constant 17 : i32
    %85 = tpu.dynamic_rotate %84 by %c17_i32_47 dim 1 : vector<8x256xf32>, i32 -> vector<8x256xf32>
    %c0_48 = arith.constant 0 : index
    %c0_49 = arith.constant 0 : index
    %c0_50 = arith.constant 0 : index
    %86 = vector.load %arg6[%c0_48, %c0_49, %c0_50] : memref<9x8x256xf32, #tpu.memory_space<vmem>>, vector<1x8x256xf32>
    %87 = vector.shape_cast %86 : vector<1x8x256xf32> to vector<8x256xf32>
    %88 = arith.mulf %85, %87 : vector<8x256xf32>
    %c16_i32_51 = arith.constant 16 : i32
    %89 = tpu.dynamic_rotate %84 by %c16_i32_51 dim 1 : vector<8x256xf32>, i32 -> vector<8x256xf32>
    %c1_52 = arith.constant 1 : index
    %c0_53 = arith.constant 0 : index
    %c0_54 = arith.constant 0 : index
    %90 = vector.load %arg6[%c1_52, %c0_53, %c0_54] : memref<9x8x256xf32, #tpu.memory_space<vmem>>, vector<1x8x256xf32>
    %91 = vector.shape_cast %90 : vector<1x8x256xf32> to vector<8x256xf32>
    %92 = arith.mulf %89, %91 : vector<8x256xf32>
    %c15_i32_55 = arith.constant 15 : i32
    %93 = tpu.dynamic_rotate %84 by %c15_i32_55 dim 1 : vector<8x256xf32>, i32 -> vector<8x256xf32>
    %c2_56 = arith.constant 2 : index
    %c0_57 = arith.constant 0 : index
    %c0_58 = arith.constant 0 : index
    %94 = vector.load %arg6[%c2_56, %c0_57, %c0_58] : memref<9x8x256xf32, #tpu.memory_space<vmem>>, vector<1x8x256xf32>
    %95 = vector.shape_cast %94 : vector<1x8x256xf32> to vector<8x256xf32>
    %96 = arith.mulf %93, %95 : vector<8x256xf32>
    %c1_i32_59 = arith.constant 1 : i32
    %97 = tpu.dynamic_rotate %84 by %c1_i32_59 dim 1 : vector<8x256xf32>, i32 -> vector<8x256xf32>
    %c3_60 = arith.constant 3 : index
    %c0_61 = arith.constant 0 : index
    %c0_62 = arith.constant 0 : index
    %98 = vector.load %arg6[%c3_60, %c0_61, %c0_62] : memref<9x8x256xf32, #tpu.memory_space<vmem>>, vector<1x8x256xf32>
    %99 = vector.shape_cast %98 : vector<1x8x256xf32> to vector<8x256xf32>
    %100 = arith.mulf %97, %99 : vector<8x256xf32>
    %101 = arith.addf %88, %100 : vector<8x256xf32>
    %c4_63 = arith.constant 4 : index
    %c0_64 = arith.constant 0 : index
    %c0_65 = arith.constant 0 : index
    %102 = vector.load %arg6[%c4_63, %c0_64, %c0_65] : memref<9x8x256xf32, #tpu.memory_space<vmem>>, vector<1x8x256xf32>
    %103 = vector.shape_cast %102 : vector<1x8x256xf32> to vector<8x256xf32>
    %104 = arith.mulf %84, %103 : vector<8x256xf32>
    %105 = arith.addf %92, %104 : vector<8x256xf32>
    %c255_i32_66 = arith.constant 255 : i32
    %106 = tpu.dynamic_rotate %84 by %c255_i32_66 dim 1 : vector<8x256xf32>, i32 -> vector<8x256xf32>
    %c5_67 = arith.constant 5 : index
    %c0_68 = arith.constant 0 : index
    %c0_69 = arith.constant 0 : index
    %107 = vector.load %arg6[%c5_67, %c0_68, %c0_69] : memref<9x8x256xf32, #tpu.memory_space<vmem>>, vector<1x8x256xf32>
    %108 = vector.shape_cast %107 : vector<1x8x256xf32> to vector<8x256xf32>
    %109 = arith.mulf %106, %108 : vector<8x256xf32>
    %110 = arith.addf %96, %109 : vector<8x256xf32>
    %c241_i32_70 = arith.constant 241 : i32
    %111 = tpu.dynamic_rotate %84 by %c241_i32_70 dim 1 : vector<8x256xf32>, i32 -> vector<8x256xf32>
    %c6_71 = arith.constant 6 : index
    %c0_72 = arith.constant 0 : index
    %c0_73 = arith.constant 0 : index
    %112 = vector.load %arg6[%c6_71, %c0_72, %c0_73] : memref<9x8x256xf32, #tpu.memory_space<vmem>>, vector<1x8x256xf32>
    %113 = vector.shape_cast %112 : vector<1x8x256xf32> to vector<8x256xf32>
    %114 = arith.mulf %111, %113 : vector<8x256xf32>
    %115 = arith.addf %101, %114 : vector<8x256xf32>
    %c240_i32_74 = arith.constant 240 : i32
    %116 = tpu.dynamic_rotate %84 by %c240_i32_74 dim 1 : vector<8x256xf32>, i32 -> vector<8x256xf32>
    %c7_75 = arith.constant 7 : index
    %c0_76 = arith.constant 0 : index
    %c0_77 = arith.constant 0 : index
    %117 = vector.load %arg6[%c7_75, %c0_76, %c0_77] : memref<9x8x256xf32, #tpu.memory_space<vmem>>, vector<1x8x256xf32>
    %118 = vector.shape_cast %117 : vector<1x8x256xf32> to vector<8x256xf32>
    %119 = arith.mulf %116, %118 : vector<8x256xf32>
    %120 = arith.addf %105, %119 : vector<8x256xf32>
    %c239_i32_78 = arith.constant 239 : i32
    %121 = tpu.dynamic_rotate %84 by %c239_i32_78 dim 1 : vector<8x256xf32>, i32 -> vector<8x256xf32>
    %c8_79 = arith.constant 8 : index
    %c0_80 = arith.constant 0 : index
    %c0_81 = arith.constant 0 : index
    %122 = vector.load %arg6[%c8_79, %c0_80, %c0_81] : memref<9x8x256xf32, #tpu.memory_space<vmem>>, vector<1x8x256xf32>
    %123 = vector.shape_cast %122 : vector<1x8x256xf32> to vector<8x256xf32>
    %124 = arith.mulf %121, %123 : vector<8x256xf32>
    %125 = arith.addf %110, %124 : vector<8x256xf32>
    %126 = arith.addf %115, %120 : vector<8x256xf32>
    %127 = arith.addf %126, %125 : vector<8x256xf32>
    %c0_82 = arith.constant 0 : index
    %c0_83 = arith.constant 0 : index
    %128 = vector.load %arg7[%c0_82, %c0_83] : memref<8x256xf32, #tpu.memory_space<vmem>>, vector<8x256xf32>
    %129 = arith.addf %127, %128 : vector<8x256xf32>
    %cst_84 = arith.constant 0.000000e+00 : f32
    %130 = vector.broadcast %cst_84 : f32 to vector<8x256xf32>
    %131 = arith.maximumf %129, %130 : vector<8x256xf32>
    %c3_i32_85 = arith.constant 3 : i32
    %132 = tpu.dynamic_rotate %131 by %c3_i32_85 dim 0 : vector<8x256xf32>, i32 -> vector<8x256xf32>
    %c0_86 = arith.constant 0 : index
    %c0_87 = arith.constant 0 : index
    %c0_88 = arith.constant 0 : index
    %133 = vector.load %arg8[%c0_86, %c0_87, %c0_88] : memref<7x8x256xf32, #tpu.memory_space<vmem>>, vector<1x8x256xf32>
    %134 = vector.shape_cast %133 : vector<1x8x256xf32> to vector<8x256xf32>
    %135 = arith.mulf %132, %134 : vector<8x256xf32>
    %c2_i32_89 = arith.constant 2 : i32
    %136 = tpu.dynamic_rotate %131 by %c2_i32_89 dim 0 : vector<8x256xf32>, i32 -> vector<8x256xf32>
    %c1_90 = arith.constant 1 : index
    %c0_91 = arith.constant 0 : index
    %c0_92 = arith.constant 0 : index
    %137 = vector.load %arg8[%c1_90, %c0_91, %c0_92] : memref<7x8x256xf32, #tpu.memory_space<vmem>>, vector<1x8x256xf32>
    %138 = vector.shape_cast %137 : vector<1x8x256xf32> to vector<8x256xf32>
    %139 = arith.mulf %136, %138 : vector<8x256xf32>
    %c1_i32_93 = arith.constant 1 : i32
    %140 = tpu.dynamic_rotate %131 by %c1_i32_93 dim 0 : vector<8x256xf32>, i32 -> vector<8x256xf32>
    %c2_94 = arith.constant 2 : index
    %c0_95 = arith.constant 0 : index
    %c0_96 = arith.constant 0 : index
    %141 = vector.load %arg8[%c2_94, %c0_95, %c0_96] : memref<7x8x256xf32, #tpu.memory_space<vmem>>, vector<1x8x256xf32>
    %142 = vector.shape_cast %141 : vector<1x8x256xf32> to vector<8x256xf32>
    %143 = arith.mulf %140, %142 : vector<8x256xf32>
    %c3_97 = arith.constant 3 : index
    %c0_98 = arith.constant 0 : index
    %c0_99 = arith.constant 0 : index
    %144 = vector.load %arg8[%c3_97, %c0_98, %c0_99] : memref<7x8x256xf32, #tpu.memory_space<vmem>>, vector<1x8x256xf32>
    %145 = vector.shape_cast %144 : vector<1x8x256xf32> to vector<8x256xf32>
    %146 = arith.mulf %131, %145 : vector<8x256xf32>
    %147 = arith.addf %135, %146 : vector<8x256xf32>
    %c7_i32_100 = arith.constant 7 : i32
    %148 = tpu.dynamic_rotate %131 by %c7_i32_100 dim 0 : vector<8x256xf32>, i32 -> vector<8x256xf32>
    %c4_101 = arith.constant 4 : index
    %c0_102 = arith.constant 0 : index
    %c0_103 = arith.constant 0 : index
    %149 = vector.load %arg8[%c4_101, %c0_102, %c0_103] : memref<7x8x256xf32, #tpu.memory_space<vmem>>, vector<1x8x256xf32>
    %150 = vector.shape_cast %149 : vector<1x8x256xf32> to vector<8x256xf32>
    %151 = arith.mulf %148, %150 : vector<8x256xf32>
    %152 = arith.addf %139, %151 : vector<8x256xf32>
    %c6_i32_104 = arith.constant 6 : i32
    %153 = tpu.dynamic_rotate %131 by %c6_i32_104 dim 0 : vector<8x256xf32>, i32 -> vector<8x256xf32>
    %c5_105 = arith.constant 5 : index
    %c0_106 = arith.constant 0 : index
    %c0_107 = arith.constant 0 : index
    %154 = vector.load %arg8[%c5_105, %c0_106, %c0_107] : memref<7x8x256xf32, #tpu.memory_space<vmem>>, vector<1x8x256xf32>
    %155 = vector.shape_cast %154 : vector<1x8x256xf32> to vector<8x256xf32>
    %156 = arith.mulf %153, %155 : vector<8x256xf32>
    %157 = arith.addf %143, %156 : vector<8x256xf32>
    %c5_i32_108 = arith.constant 5 : i32
    %158 = tpu.dynamic_rotate %131 by %c5_i32_108 dim 0 : vector<8x256xf32>, i32 -> vector<8x256xf32>
    %c6_109 = arith.constant 6 : index
    %c0_110 = arith.constant 0 : index
    %c0_111 = arith.constant 0 : index
    %159 = vector.load %arg8[%c6_109, %c0_110, %c0_111] : memref<7x8x256xf32, #tpu.memory_space<vmem>>, vector<1x8x256xf32>
    %160 = vector.shape_cast %159 : vector<1x8x256xf32> to vector<8x256xf32>
    %161 = arith.mulf %158, %160 : vector<8x256xf32>
    %162 = arith.addf %147, %161 : vector<8x256xf32>
    %163 = arith.addf %162, %152 : vector<8x256xf32>
    %164 = arith.addf %163, %157 : vector<8x256xf32>
    %c0_112 = arith.constant 0 : index
    %c0_113 = arith.constant 0 : index
    %165 = vector.load %arg9[%c0_112, %c0_113] : memref<8x256xf32, #tpu.memory_space<vmem>>, vector<8x256xf32>
    %166 = arith.addf %164, %165 : vector<8x256xf32>
    %cst_114 = arith.constant 0.000000e+00 : f32
    %167 = vector.broadcast %cst_114 : f32 to vector<8x256xf32>
    %168 = arith.maximumf %166, %167 : vector<8x256xf32>
    %169 = arith.addf %168, %0 : vector<8x256xf32>
    %cst_115 = arith.constant 0.000000e+00 : f32
    %170 = vector.broadcast %cst_115 : f32 to vector<8x256xf32>
    %171 = arith.maximumf %169, %170 : vector<8x256xf32>
    %c0_116 = arith.constant 0 : index
    %c0_117 = arith.constant 0 : index
    %172 = vector.load %arg10[%c0_116, %c0_117] : memref<8x256xf32, #tpu.memory_space<vmem>>, vector<8x256xf32>
    tpu.vector_store %arg10[%c0_116, %c0_117], %171 {strides = array<i32>} : memref<8x256xf32, #tpu.memory_space<vmem>>, vector<8x256xf32>,
    return
  }
  func.func @transform_0(%arg0: i32) -> (i32, i32) {
    %c0_i32 = arith.constant 0 : i32
    %c0_i32_0 = arith.constant 0 : i32
    return %arg0, %c0_i32 : i32, i32
  }
  func.func @transform_1(%arg0: i32) -> (i32, i32, i32) {
    %c0_i32 = arith.constant 0 : i32
    %c0_i32_0 = arith.constant 0 : i32
    %c0_i32_1 = arith.constant 0 : i32
    %c0_i32_2 = arith.constant 0 : i32
    return %c0_i32, %c0_i32_0, %c0_i32_1 : i32, i32, i32
  }
  func.func @transform_2(%arg0: i32) -> (i32, i32) {
    %c0_i32 = arith.constant 0 : i32
    %c0_i32_0 = arith.constant 0 : i32
    %c0_i32_1 = arith.constant 0 : i32
    return %c0_i32, %c0_i32_0 : i32, i32
  }
  func.func @transform_3(%arg0: i32) -> (i32, i32, i32) {
    %c0_i32 = arith.constant 0 : i32
    %c0_i32_0 = arith.constant 0 : i32
    %c0_i32_1 = arith.constant 0 : i32
    %c0_i32_2 = arith.constant 0 : i32
    return %c0_i32, %c0_i32_0, %c0_i32_1 : i32, i32, i32
  }
  func.func @transform_4(%arg0: i32) -> (i32, i32) {
    %c0_i32 = arith.constant 0 : i32
    %c0_i32_0 = arith.constant 0 : i32
    %c0_i32_1 = arith.constant 0 : i32
    return %c0_i32, %c0_i32_0 : i32, i32
  }
  func.func @transform_5(%arg0: i32) -> (i32, i32, i32) {
    %c0_i32 = arith.constant 0 : i32
    %c0_i32_0 = arith.constant 0 : i32
    %c0_i32_1 = arith.constant 0 : i32
    %c0_i32_2 = arith.constant 0 : i32
    return %c0_i32, %c0_i32_0, %c0_i32_1 : i32, i32, i32
  }
  func.func @transform_6(%arg0: i32) -> (i32, i32) {
    %c0_i32 = arith.constant 0 : i32
    %c0_i32_0 = arith.constant 0 : i32
    %c0_i32_1 = arith.constant 0 : i32
    return %c0_i32, %c0_i32_0 : i32, i32
  }
  func.func @transform_7(%arg0: i32) -> (i32, i32, i32) {
    %c0_i32 = arith.constant 0 : i32
    %c0_i32_0 = arith.constant 0 : i32
    %c0_i32_1 = arith.constant 0 : i32
    %c0_i32_2 = arith.constant 0 : i32
    return %c0_i32, %c0_i32_0, %c0_i32_1 : i32, i32, i32
  }
  func.func @transform_8(%arg0: i32) -> (i32, i32) {
    %c0_i32 = arith.constant 0 : i32
    %c0_i32_0 = arith.constant 0 : i32
    %c0_i32_1 = arith.constant 0 : i32
    return %c0_i32, %c0_i32_0 : i32, i32
  }
  func.func @transform_9(%arg0: i32) -> (i32, i32) {
    %c0_i32 = arith.constant 0 : i32
    %c0_i32_0 = arith.constant 0 : i32
    return %arg0, %c0_i32 : i32, i32
  }
}

</mosaic_0001>

<llo_original>
// kernel: tpu_custom_call.1
$region0: #{tpu_custom_call.1}
  #allocation0 [shape = 'u32[]', space=smem, size = 0x4, offset = 0x4, fixed_abs, tag = 'smem constant byte address 0x4 - core index']
  #allocation1 [shape = 'u32[144,128]{1,0:T(1,128)}', space=vmem, size = 0x12000, scoped, tag = 'internal scratch']
  %s0 = inlined_call_operand.hbm [shape: f32[8,256], index: 0, kind: input, shape index: {}]
  %s1 = inlined_call_operand.hbm [shape: f32[9,8,256], index: 1, kind: input, shape index: {}]
  %s2 = inlined_call_operand.hbm [shape: f32[8,256], index: 2, kind: input, shape index: {}]
  %s3 = inlined_call_operand.hbm [shape: f32[7,8,256], index: 3, kind: input, shape index: {}]
  %s4 = inlined_call_operand.hbm [shape: f32[8,256], index: 4, kind: input, shape index: {}]
  %s5 = inlined_call_operand.hbm [shape: f32[9,8,256], index: 5, kind: input, shape index: {}]
  %s6 = inlined_call_operand.vmem [shape: f32[8,256], index: 6, kind: input, shape index: {}]
  %s7 = inlined_call_operand.hbm [shape: f32[7,8,256], index: 7, kind: input, shape index: {}]
  %s8 = inlined_call_operand.hbm [shape: f32[8,256], index: 8, kind: input, shape index: {}]
  %s9 = inlined_call_operand.hbm [shape: f32[8,256], index: 9, kind: output, shape index: {}]
  %s10 = sld [smem:[#allocation0]]
  $region78: #{tpu_custom_call.1} parent=0
    _
  %s12 = ssub.s32 1, %s10
  %s13 = scalar_select 0, %s12, %s10
  $region1: #{tpu_custom_call.1} parent=0
    #allocation2 [shape = 'u8[8192]{0}', space=vmem, size = 0x2000, scoped, tag = 'input window, operand 0, single buffered']
    #allocation3 [shape = 's32[1]{0}', space=sflag, size = 0x4, scoped, tag = 'scoped memory for tpu_custom_call.1']
    #allocation4 [shape = 's32[1]{0}', space=sflag, size = 0x4, scoped, tag = 'scoped memory for tpu_custom_call.1']
    #allocation5 [shape = 'u8[73728]{0}', space=vmem, size = 0x12000, scoped, tag = 'input window, operand 1, single buffered']
    #allocation6 [shape = 's32[1]{0}', space=sflag, size = 0x4, scoped, tag = 'scoped memory for tpu_custom_call.1']
    #allocation7 [shape = 'u8[8192]{0}', space=vmem, size = 0x2000, scoped, tag = 'input window, operand 2, single buffered']
    #allocation8 [shape = 'u8[57344]{0}', space=vmem, size = 0xe000, scoped, tag = 'input window, operand 3, single buffered']
    #allocation9 [shape = 's32[1]{0}', space=sflag, size = 0x4, scoped, tag = 'scoped memory for tpu_custom_call.1']
    #allocation10 [shape = 'u8[8192]{0}', space=vmem, size = 0x2000, scoped, tag = 'input window, operand 4, single buffered']
    #allocation11 [shape = 'u8[73728]{0}', space=vmem, size = 0x12000, scoped, tag = 'input window, operand 5, single buffered']
    #allocation12 [shape = 's32[1]{0}', space=sflag, size = 0x4, scoped, tag = 'scoped memory for tpu_custom_call.1']
    #allocation13 [shape = 'u8[57344]{0}', space=vmem, size = 0xe000, scoped, tag = 'input window, operand 7, single buffered']
    #allocation14 [shape = 'u8[8192]{0}', space=vmem, size = 0x2000, scoped, tag = 'input window, operand 8, single buffered']
    #allocation15 [shape = 's32[1]{0}', space=sflag, size = 0x4, scoped, tag = 'scoped memory for tpu_custom_call.1']
    #allocation16 [shape = 'u8[8192]{0}', space=vmem, size = 0x2000, scoped, tag = 'output window, operand 0, single buffered']
    %14 = vsyncpa [#allocation3], 0
    %15 = vsyncpa [#allocation6], 0
    %16 = vsyncpa [#allocation9], 0
    %17 = vsyncpa [#allocation12], 0
    %18 = vsyncpa [#allocation15], 0
    %19 = vsyncpa [#allocation4], 0
    // Predicated region
    $region2: #{tpu_custom_call.1} parent=1 // pred_check
      _
    $region3: #{tpu_custom_call.1} parent=1 // pred_check_branch
      %21 = sbr.rel (0) target = $region5
    $region4: #{tpu_custom_call.1} parent=1 // pred_region
      %s23 = ssub.s32 256, 256
      %24 = vsyncadd [#allocation3], %s23
      %s26 = sshll.u32 [#allocation2], 4
      %s27 = int_to_ptr.vmem [resolvable:$true] %s26
      %29 = dma.hbm_to_vmem [thread:$0]  %s0, 256, %s27, [#allocation3]
    $region5: #{tpu_custom_call.1} parent=1 // pred_fallthru
      _
    // Predicated region
    $region6: #{tpu_custom_call.1} parent=1 // pred_check
      _
    $region7: #{tpu_custom_call.1} parent=1 // pred_check_branch
      %31 = sbr.rel (0) target = $region9
    $region8: #{tpu_custom_call.1} parent=1 // pred_region
      %s33 = ssub.s32 2304, 2304
      %34 = vsyncadd [#allocation6], %s33
      %s35 = sshll.u32 [#allocation5], 4
      %s36 = int_to_ptr.vmem [resolvable:$true] %s35
      %41 = dma.hbm_to_vmem [thread:$0]  %s1, 2304, %s36, [#allocation6], 256, 256, 16
    $region9: #{tpu_custom_call.1} parent=1 // pred_fallthru
      _
    // Predicated region
    $region10: #{tpu_custom_call.1} parent=1 // pred_check
      _
    $region11: #{tpu_custom_call.1} parent=1 // pred_check_branch
      %43 = sbr.rel (0) target = $region13
    $region12: #{tpu_custom_call.1} parent=1 // pred_region
      %s45 = ssub.s32 256, 256
      %46 = vsyncadd [#allocation6], %s45
      %s48 = sshll.u32 [#allocation7], 4
      %s49 = int_to_ptr.vmem [resolvable:$true] %s48
      %51 = dma.hbm_to_vmem [thread:$0]  %s2, 256, %s49, [#allocation6]
    $region13: #{tpu_custom_call.1} parent=1 // pred_fallthru
      _
    // Predicated region
    $region14: #{tpu_custom_call.1} parent=1 // pred_check
      _
    $region15: #{tpu_custom_call.1} parent=1 // pred_check_branch
      %53 = sbr.rel (0) target = $region17
    $region16: #{tpu_custom_call.1} parent=1 // pred_region
      %s55 = ssub.s32 1792, 1792
      %56 = vsyncadd [#allocation9], %s55
      %s57 = sshll.u32 [#allocation8], 4
      %s58 = int_to_ptr.vmem [resolvable:$true] %s57
      %63 = dma.hbm_to_vmem [thread:$0]  %s3, 1792, %s58, [#allocation9], 256, 256, 16
    $region17: #{tpu_custom_call.1} parent=1 // pred_fallthru
      _
    // Predicated region
    $region18: #{tpu_custom_call.1} parent=1 // pred_check
      _
    $region19: #{tpu_custom_call.1} parent=1 // pred_check_branch
      %65 = sbr.rel (0) target = $region21
    $region20: #{tpu_custom_call.1} parent=1 // pred_region
      %s67 = ssub.s32 256, 256
      %68 = vsyncadd [#allocation9], %s67
      %s70 = sshll.u32 [#allocation10], 4
      %s71 = int_to_ptr.vmem [resolvable:$true] %s70
      %73 = dma.hbm_to_vmem [thread:$0]  %s4, 256, %s71, [#allocation9]
    $region21: #{tpu_custom_call.1} parent=1 // pred_fallthru
      _
    // Predicated region
    $region22: #{tpu_custom_call.1} parent=1 // pred_check
      _
    $region23: #{tpu_custom_call.1} parent=1 // pred_check_branch
      %75 = sbr.rel (0) target = $region25
    $region24: #{tpu_custom_call.1} parent=1 // pred_region
      %s77 = ssub.s32 2304, 2304
      %78 = vsyncadd [#allocation12], %s77
      %s79 = sshll.u32 [#allocation11], 4
      %s80 = int_to_ptr.vmem [resolvable:$true] %s79
      %85 = dma.hbm_to_vmem [thread:$0]  %s5, 2304, %s80, [#allocation12], 256, 256, 16
    $region25: #{tpu_custom_call.1} parent=1 // pred_fallthru
      _
    // Predicated region
    $region26: #{tpu_custom_call.1} parent=1 // pred_check
      _
    $region27: #{tpu_custom_call.1} parent=1 // pred_check_branch
      %87 = sbr.rel (0) target = $region29
    $region28: #{tpu_custom_call.1} parent=1 // pred_region
      _
    $region29: #{tpu_custom_call.1} parent=1 // pred_fallthru
      _
    // Predicated region
    $region30: #{tpu_custom_call.1} parent=1 // pred_check
      _
    $region31: #{tpu_custom_call.1} parent=1 // pred_check_branch
      %89 = sbr.rel (0) target = $region33
    $region32: #{tpu_custom_call.1} parent=1 // pred_region
      %s91 = ssub.s32 1792, 1792
      %92 = vsyncadd [#allocation12], %s91
      %s93 = sshll.u32 [#allocation13], 4
      %s94 = int_to_ptr.vmem [resolvable:$true] %s93
      %99 = dma.hbm_to_vmem [thread:$0]  %s7, 1792, %s94, [#allocation12], 256, 256, 16
    $region33: #{tpu_custom_call.1} parent=1 // pred_fallthru
      _
    // Predicated region
    $region34: #{tpu_custom_call.1} parent=1 // pred_check
      _
    $region35: #{tpu_custom_call.1} parent=1 // pred_check_branch
      %101 = sbr.rel (0) target = $region37
    $region36: #{tpu_custom_call.1} parent=1 // pred_region
      %s103 = ssub.s32 256, 256
      %104 = vsyncadd [#allocation15], %s103
      %s106 = sshll.u32 [#allocation14], 4
      %s107 = int_to_ptr.vmem [resolvable:$true] %s106
      %109 = dma.hbm_to_vmem [thread:$0]  %s8, 256, %s107, [#allocation15]
    $region37: #{tpu_custom_call.1} parent=1 // pred_fallthru
      _
    // Predicated region
    $region38: #{tpu_custom_call.1} parent=1 // pred_check
      _
    $region39: #{tpu_custom_call.1} parent=1 // pred_check_branch
      %111 = sbr.rel (0) target = $region41
    $region40: #{tpu_custom_call.1} parent=1 // pred_region
      %112 = dma.done [#allocation3], 256
    $region41: #{tpu_custom_call.1} parent=1 // pred_fallthru
      _
    // Predicated region
    $region42: #{tpu_custom_call.1} parent=1 // pred_check
      _
    $region43: #{tpu_custom_call.1} parent=1 // pred_check_branch
      %114 = sbr.rel (0) target = $region45
    $region44: #{tpu_custom_call.1} parent=1 // pred_region
      %115 = dma.done [#allocation6], 2304
    $region45: #{tpu_custom_call.1} parent=1 // pred_fallthru
      _
    // Predicated region
    $region46: #{tpu_custom_call.1} parent=1 // pred_check
      _
    $region47: #{tpu_custom_call.1} parent=1 // pred_check_branch
      %117 = sbr.rel (0) target = $region49
    $region48: #{tpu_custom_call.1} parent=1 // pred_region
      %118 = dma.done [#allocation6], 256
    $region49: #{tpu_custom_call.1} parent=1 // pred_fallthru
      _
    // Predicated region
    $region50: #{tpu_custom_call.1} parent=1 // pred_check
      _
    $region51: #{tpu_custom_call.1} parent=1 // pred_check_branch
      %120 = sbr.rel (0) target = $region53
    $region52: #{tpu_custom_call.1} parent=1 // pred_region
      %121 = dma.done [#allocation9], 1792
    $region53: #{tpu_custom_call.1} parent=1 // pred_fallthru
      _
    // Predicated region
    $region54: #{tpu_custom_call.1} parent=1 // pred_check
      _
    $region55: #{tpu_custom_call.1} parent=1 // pred_check_branch
      %123 = sbr.rel (0) target = $region57
    $region56: #{tpu_custom_call.1} parent=1 // pred_region
      %124 = dma.done [#allocation9], 256
    $region57: #{tpu_custom_call.1} parent=1 // pred_fallthru
      _
    // Predicated region
    $region58: #{tpu_custom_call.1} parent=1 // pred_check
      _
    $region59: #{tpu_custom_call.1} parent=1 // pred_check_branch
      %126 = sbr.rel (0) target = $region61
    $region60: #{tpu_custom_call.1} parent=1 // pred_region
      %127 = dma.done [#allocation12], 2304
    $region61: #{tpu_custom_call.1} parent=1 // pred_fallthru
      _
    // Predicated region
    $region62: #{tpu_custom_call.1} parent=1 // pred_check
      _
    $region63: #{tpu_custom_call.1} parent=1 // pred_check_branch
      %129 = sbr.rel (0) target = $region65
    $region64: #{tpu_custom_call.1} parent=1 // pred_region
      %130 = dma.done [#allocation12], 1792
    $region65: #{tpu_custom_call.1} parent=1 // pred_fallthru
      _
    // Predicated region
    $region66: #{tpu_custom_call.1} parent=1 // pred_check
      _
    $region67: #{tpu_custom_call.1} parent=1 // pred_check_branch
      %132 = sbr.rel (0) target = $region69
    $region68: #{tpu_custom_call.1} parent=1 // pred_region
      %133 = dma.done [#allocation15], 256
    $region69: #{tpu_custom_call.1} parent=1 // pred_fallthru
      _
    %v134 = vld [vmem:[#allocation2] sm:$0xff]
    %v135 = vld [vmem:[#allocation2 + $0x8] sm:$0xff]
    %136 = vrot.lane.b32.xlu0 %v134, 17
    %v137 = vpop.permute.xlu0 %136
    %138 = vrot.lane.b32.xlu0 %v135, 17
    %v139 = vpop.permute.xlu0 %138
    %v140 = vlaneseq
    %v141 = vand.u32 %v140, 127
    %vm142 = vcmp.lt.s32.totalorder %v141, 17
    %v143 = vsel %vm142, %v137, %v139
    %v144 = vsel %vm142, %v139, %v137
    %v145 = vld [vmem:[#allocation5] sm:$0xff]
    %v146 = vld [vmem:[#allocation5 + $0x8] sm:$0xff]
    %v147 = vmul.f32 %v144, %v145
    %v148 = vmul.f32 %v143, %v146
    %149 = vrot.lane.b32.xlu0 %v134, 16
    %v150 = vpop.permute.xlu0 %149
    %151 = vrot.lane.b32.xlu0 %v135, 16
    %v152 = vpop.permute.xlu0 %151
    %vm153 = vcmp.lt.s32.totalorder %v141, 16
    %v154 = vsel %vm153, %v150, %v152
    %v155 = vsel %vm153, %v152, %v150
    %s156 = scalar_lea.vmem [#allocation5], 16
    %v157 = vld [vmem:[%s156] sm:$0xff]
    %v158 = vld [vmem:[%s156 + $0x8] sm:$0xff]
    %v159 = vmul.f32 %v155, %v157
    %v160 = vmul.f32 %v154, %v158
    %161 = vrot.lane.b32.xlu0 %v134, 15
    %v162 = vpop.permute.xlu0 %161
    %163 = vrot.lane.b32.xlu0 %v135, 15
    %v164 = vpop.permute.xlu0 %163
    %vm165 = vcmp.lt.s32.totalorder %v141, 15
    %v166 = vsel %vm165, %v162, %v164
    %v167 = vsel %vm165, %v164, %v162
    %s168 = scalar_lea.vmem [#allocation5], 32
    %v169 = vld [vmem:[%s168] sm:$0xff]
    %v170 = vld [vmem:[%s168 + $0x8] sm:$0xff]
    %v171 = vmul.f32 %v167, %v169
    %v172 = vmul.f32 %v166, %v170
    %173 = vrot.lane.b32.xlu0 %v134, 1
    %v174 = vpop.permute.xlu0 %173
    %175 = vrot.lane.b32.xlu0 %v135, 1
    %v176 = vpop.permute.xlu0 %175
    %vm177 = vcmp.lt.s32.totalorder %v141, 1
    %v178 = vsel %vm177, %v174, %v176
    %v179 = vsel %vm177, %v176, %v174
    %s180 = scalar_lea.vmem [#allocation5], 48
    %v181 = vld [vmem:[%s180] sm:$0xff]
    %v182 = vld [vmem:[%s180 + $0x8] sm:$0xff]
    %v183 = vmul.f32 %v179, %v181
    %v184 = vmul.f32 %v178, %v182
    %v185 = vadd.f32 %v147, %v183
    %v186 = vadd.f32 %v148, %v184
    %s187 = scalar_lea.vmem [#allocation5], 64
    %v188 = vld [vmem:[%s187] sm:$0xff]
    %v189 = vld [vmem:[%s187 + $0x8] sm:$0xff]
    %v190 = vmul.f32 %v134, %v188
    %v191 = vmul.f32 %v135, %v189
    %v192 = vadd.f32 %v159, %v190
    %v193 = vadd.f32 %v160, %v191
    %194 = vrot.lane.b32.xlu0 %v134, 127
    %v195 = vpop.permute.xlu0 %194
    %196 = vrot.lane.b32.xlu0 %v135, 127
    %v197 = vpop.permute.xlu0 %196
    %vm198 = vcmp.lt.s32.totalorder %v141, 127
    %v199 = vsel %vm198, %v195, %v197
    %v200 = vsel %vm198, %v197, %v195
    %s201 = scalar_lea.vmem [#allocation5], 80
    %v202 = vld [vmem:[%s201] sm:$0xff]
    %v203 = vld [vmem:[%s201 + $0x8] sm:$0xff]
    %v204 = vmul.f32 %v199, %v202
    %v205 = vmul.f32 %v200, %v203
    %v206 = vadd.f32 %v171, %v204
    %v207 = vadd.f32 %v172, %v205
    %208 = vrot.lane.b32.xlu0 %v134, 113
    %v209 = vpop.permute.xlu0 %208
    %210 = vrot.lane.b32.xlu0 %v135, 113
    %v211 = vpop.permute.xlu0 %210
    %vm212 = vcmp.lt.s32.totalorder %v141, 113
    %v213 = vsel %vm212, %v209, %v211
    %v214 = vsel %vm212, %v211, %v209
    %s215 = scalar_lea.vmem [#allocation5], 96
    %v216 = vld [vmem:[%s215] sm:$0xff]
    %v217 = vld [vmem:[%s215 + $0x8] sm:$0xff]
    %v218 = vmul.f32 %v213, %v216
    %v219 = vmul.f32 %v214, %v217
    %v220 = vadd.f32 %v185, %v218
    %v221 = vadd.f32 %v186, %v219
    %222 = vrot.lane.b32.xlu0 %v134, 112
    %v223 = vpop.permute.xlu0 %222
    %224 = vrot.lane.b32.xlu0 %v135, 112
    %v225 = vpop.permute.xlu0 %224
    %vm226 = vcmp.lt.s32.totalorder %v141, 112
    %v227 = vsel %vm226, %v223, %v225
    %v228 = vsel %vm226, %v225, %v223
    %s229 = scalar_lea.vmem [#allocation5], 112
    %v230 = vld [vmem:[%s229] sm:$0xff]
    %v231 = vld [vmem:[%s229 + $0x8] sm:$0xff]
    %v232 = vmul.f32 %v227, %v230
    %v233 = vmul.f32 %v228, %v231
    %v234 = vadd.f32 %v192, %v232
    %v235 = vadd.f32 %v193, %v233
    %236 = vrot.lane.b32.xlu0 %v134, 111
    %v237 = vpop.permute.xlu0 %236
    %238 = vrot.lane.b32.xlu0 %v135, 111
    %v239 = vpop.permute.xlu0 %238
    %vm240 = vcmp.lt.s32.totalorder %v141, 111
    %v241 = vsel %vm240, %v237, %v239
    %v242 = vsel %vm240, %v239, %v237
    %s243 = scalar_lea.vmem [#allocation5], 128
    %v244 = vld [vmem:[%s243] sm:$0xff]
    %v245 = vld [vmem:[%s243 + $0x8] sm:$0xff]
    %v246 = vmul.f32 %v241, %v244
    %v247 = vmul.f32 %v242, %v245
    %v248 = vadd.f32 %v206, %v246
    %v249 = vadd.f32 %v207, %v247
    %v250 = vadd.f32 %v220, %v234
    %v251 = vadd.f32 %v221, %v235
    %v252 = vadd.f32 %v250, %v248
    %v253 = vadd.f32 %v251, %v249
    %v254 = vld [vmem:[#allocation7] sm:$0xff]
    %v255 = vld [vmem:[#allocation7 + $0x8] sm:$0xff]
    %v256 = vadd.f32 %v252, %v254
    %v257 = vadd.f32 %v253, %v255
    %v258 = vmax.f32 %v256, 0.0
    %v259 = vmax.f32 %v257, 0.0
    %v260 = vrot.slane %v258, 5
    %v261 = vrot.slane %v259, 5
    %v262 = vld [vmem:[#allocation8] sm:$0xff]
    %v263 = vld [vmem:[#allocation8 + $0x8] sm:$0xff]
    %v264 = vmul.f32 %v260, %v262
    %v265 = vmul.f32 %v261, %v263
    %v266 = vrot.slane %v258, 6
    %v267 = vrot.slane %v259, 6
    %s268 = scalar_lea.vmem [#allocation8], 16
    %v269 = vld [vmem:[%s268] sm:$0xff]
    %v270 = vld [vmem:[%s268 + $0x8] sm:$0xff]
    %v271 = vmul.f32 %v266, %v269
    %v272 = vmul.f32 %v267, %v270
    %v273 = vrot.slane %v258, 7
    %v274 = vrot.slane %v259, 7
    %s275 = scalar_lea.vmem [#allocation8], 32
    %v276 = vld [vmem:[%s275] sm:$0xff]
    %v277 = vld [vmem:[%s275 + $0x8] sm:$0xff]
    %v278 = vmul.f32 %v273, %v276
    %v279 = vmul.f32 %v274, %v277
    %s280 = scalar_lea.vmem [#allocation8], 48
    %v281 = vld [vmem:[%s280] sm:$0xff]
    %v282 = vld [vmem:[%s280 + $0x8] sm:$0xff]
    %v283 = vmul.f32 %v258, %v281
    %v284 = vmul.f32 %v259, %v282
    %v285 = vadd.f32 %v264, %v283
    %v286 = vadd.f32 %v265, %v284
    %v287 = vrot.slane %v258, 1
    %v288 = vrot.slane %v259, 1
    %s289 = scalar_lea.vmem [#allocation8], 64
    %v290 = vld [vmem:[%s289] sm:$0xff]
    %v291 = vld [vmem:[%s289 + $0x8] sm:$0xff]
    %v292 = vmul.f32 %v287, %v290
    %v293 = vmul.f32 %v288, %v291
    %v294 = vadd.f32 %v271, %v292
    %v295 = vadd.f32 %v272, %v293
    %v296 = vrot.slane %v258, 2
    %v297 = vrot.slane %v259, 2
    %s298 = scalar_lea.vmem [#allocation8], 80
    %v299 = vld [vmem:[%s298] sm:$0xff]
    %v300 = vld [vmem:[%s298 + $0x8] sm:$0xff]
    %v301 = vmul.f32 %v296, %v299
    %v302 = vmul.f32 %v297, %v300
    %v303 = vadd.f32 %v278, %v301
    %v304 = vadd.f32 %v279, %v302
    %v305 = vrot.slane %v258, 3
    %v306 = vrot.slane %v259, 3
    %s307 = scalar_lea.vmem [#allocation8], 96
    %v308 = vld [vmem:[%s307] sm:$0xff]
    %v309 = vld [vmem:[%s307 + $0x8] sm:$0xff]
    %v310 = vmul.f32 %v305, %v308
    %v311 = vmul.f32 %v306, %v309
    %v312 = vadd.f32 %v285, %v310
    %v313 = vadd.f32 %v286, %v311
    %v314 = vadd.f32 %v312, %v294
    %v315 = vadd.f32 %v313, %v295
    %v316 = vadd.f32 %v314, %v303
    %v317 = vadd.f32 %v315, %v304
    %v318 = vld [vmem:[#allocation10] sm:$0xff]
    %v319 = vld [vmem:[#allocation10 + $0x8] sm:$0xff]
    %v320 = vadd.f32 %v316, %v318
    %v321 = vadd.f32 %v317, %v319
    %v322 = vmax.f32 %v320, 0.0
    %v323 = vmax.f32 %v321, 0.0
    %324 = vrot.lane.b32.xlu0 %v322, 17
    %v325 = vpop.permute.xlu0 %324
    %326 = vrot.lane.b32.xlu0 %v323, 17
    %v327 = vpop.permute.xlu0 %326
    %v328 = vsel %vm142, %v325, %v327
    %v329 = vsel %vm142, %v327, %v325
    %v330 = vld [vmem:[#allocation11] sm:$0xff]
    %v331 = vld [vmem:[#allocation11 + $0x8] sm:$0xff]
    %v332 = vmul.f32 %v329, %v330
    %v333 = vmul.f32 %v328, %v331
    %334 = vrot.lane.b32.xlu0 %v322, 16
    %v335 = vpop.permute.xlu0 %334
    %336 = vrot.lane.b32.xlu0 %v323, 16
    %v337 = vpop.permute.xlu0 %336
    %v338 = vsel %vm153, %v335, %v337
    %v339 = vsel %vm153, %v337, %v335
    %s340 = scalar_lea.vmem [#allocation11], 16
    %v341 = vld [vmem:[%s340] sm:$0xff]
    %v342 = vld [vmem:[%s340 + $0x8] sm:$0xff]
    %v343 = vmul.f32 %v339, %v341
    %v344 = vmul.f32 %v338, %v342
    %345 = vrot.lane.b32.xlu0 %v322, 15
    %v346 = vpop.permute.xlu0 %345
    %347 = vrot.lane.b32.xlu0 %v323, 15
    %v348 = vpop.permute.xlu0 %347
    %v349 = vsel %vm165, %v346, %v348
    %v350 = vsel %vm165, %v348, %v346
    %s351 = scalar_lea.vmem [#allocation11], 32
    %v352 = vld [vmem:[%s351] sm:$0xff]
    %v353 = vld [vmem:[%s351 + $0x8] sm:$0xff]
    %v354 = vmul.f32 %v350, %v352
    %v355 = vmul.f32 %v349, %v353
    %356 = vrot.lane.b32.xlu0 %v322, 1
    %v357 = vpop.permute.xlu0 %356
    %358 = vrot.lane.b32.xlu0 %v323, 1
    %v359 = vpop.permute.xlu0 %358
    %v360 = vsel %vm177, %v357, %v359
    %v361 = vsel %vm177, %v359, %v357
    %s362 = scalar_lea.vmem [#allocation11], 48
    %v363 = vld [vmem:[%s362] sm:$0xff]
    %v364 = vld [vmem:[%s362 + $0x8] sm:$0xff]
    %v365 = vmul.f32 %v361, %v363
    %v366 = vmul.f32 %v360, %v364
    %v367 = vadd.f32 %v332, %v365
    %v368 = vadd.f32 %v333, %v366
    %s369 = scalar_lea.vmem [#allocation11], 64
    %v370 = vld [vmem:[%s369] sm:$0xff]
    %v371 = vld [vmem:[%s369 + $0x8] sm:$0xff]
    %v372 = vmul.f32 %v322, %v370
    %v373 = vmul.f32 %v323, %v371
    %v374 = vadd.f32 %v343, %v372
    %v375 = vadd.f32 %v344, %v373
    %376 = vrot.lane.b32.xlu0 %v322, 127
    %v377 = vpop.permute.xlu0 %376
    %378 = vrot.lane.b32.xlu0 %v323, 127
    %v379 = vpop.permute.xlu0 %378
    %v380 = vsel %vm198, %v377, %v379
    %v381 = vsel %vm198, %v379, %v377
    %s382 = scalar_lea.vmem [#allocation11], 80
    %v383 = vld [vmem:[%s382] sm:$0xff]
    %v384 = vld [vmem:[%s382 + $0x8] sm:$0xff]
    %v385 = vmul.f32 %v380, %v383
    %v386 = vmul.f32 %v381, %v384
    %v387 = vadd.f32 %v354, %v385
    %v388 = vadd.f32 %v355, %v386
    %389 = vrot.lane.b32.xlu0 %v322, 113
    %v390 = vpop.permute.xlu0 %389
    %391 = vrot.lane.b32.xlu0 %v323, 113
    %v392 = vpop.permute.xlu0 %391
    %v393 = vsel %vm212, %v390, %v392
    %v394 = vsel %vm212, %v392, %v390
    %s395 = scalar_lea.vmem [#allocation11], 96
    %v396 = vld [vmem:[%s395] sm:$0xff]
    %v397 = vld [vmem:[%s395 + $0x8] sm:$0xff]
    %v398 = vmul.f32 %v393, %v396
    %v399 = vmul.f32 %v394, %v397
    %v400 = vadd.f32 %v367, %v398
    %v401 = vadd.f32 %v368, %v399
    %402 = vrot.lane.b32.xlu0 %v322, 112
    %v403 = vpop.permute.xlu0 %402
    %404 = vrot.lane.b32.xlu0 %v323, 112
    %v405 = vpop.permute.xlu0 %404
    %v406 = vsel %vm226, %v403, %v405
    %v407 = vsel %vm226, %v405, %v403
    %s408 = scalar_lea.vmem [#allocation11], 112
    %v409 = vld [vmem:[%s408] sm:$0xff]
    %v410 = vld [vmem:[%s408 + $0x8] sm:$0xff]
    %v411 = vmul.f32 %v406, %v409
    %v412 = vmul.f32 %v407, %v410
    %v413 = vadd.f32 %v374, %v411
    %v414 = vadd.f32 %v375, %v412
    %415 = vrot.lane.b32.xlu0 %v322, 111
    %v416 = vpop.permute.xlu0 %415
    %417 = vrot.lane.b32.xlu0 %v323, 111
    %v418 = vpop.permute.xlu0 %417
    %v419 = vsel %vm240, %v416, %v418
    %v420 = vsel %vm240, %v418, %v416
    %s421 = scalar_lea.vmem [#allocation11], 128
    %v422 = vld [vmem:[%s421] sm:$0xff]
    %v423 = vld [vmem:[%s421 + $0x8] sm:$0xff]
    %v424 = vmul.f32 %v419, %v422
    %v425 = vmul.f32 %v420, %v423
    %v426 = vadd.f32 %v387, %v424
    %v427 = vadd.f32 %v388, %v425
    %v428 = vadd.f32 %v400, %v413
    %v429 = vadd.f32 %v401, %v414
    %v430 = vadd.f32 %v428, %v426
    %v431 = vadd.f32 %v429, %v427
    %v432 = vld [vmem:[%s6] sm:$0xff]
    %v433 = vld [vmem:[%s6 + $0x8] sm:$0xff]
    %v434 = vadd.f32 %v430, %v432
    %v435 = vadd.f32 %v431, %v433
    %v436 = vmax.f32 %v434, 0.0
    %v437 = vmax.f32 %v435, 0.0
    %v438 = vrot.slane %v436, 5
    %v439 = vrot.slane %v437, 5
    %v440 = vld [vmem:[#allocation13] sm:$0xff]
    %v441 = vld [vmem:[#allocation13 + $0x8] sm:$0xff]
    %v442 = vmul.f32 %v438, %v440
    %v443 = vmul.f32 %v439, %v441
    %v444 = vrot.slane %v436, 6
    %v445 = vrot.slane %v437, 6
    %s446 = scalar_lea.vmem [#allocation13], 16
    %v447 = vld [vmem:[%s446] sm:$0xff]
    %v448 = vld [vmem:[%s446 + $0x8] sm:$0xff]
    %v449 = vmul.f32 %v444, %v447
    %v450 = vmul.f32 %v445, %v448
    %v451 = vrot.slane %v436, 7
    %v452 = vrot.slane %v437, 7
    %s453 = scalar_lea.vmem [#allocation13], 32
    %v454 = vld [vmem:[%s453] sm:$0xff]
    %v455 = vld [vmem:[%s453 + $0x8] sm:$0xff]
    %v456 = vmul.f32 %v451, %v454
    %v457 = vmul.f32 %v452, %v455
    %s458 = scalar_lea.vmem [#allocation13], 48
    %v459 = vld [vmem:[%s458] sm:$0xff]
    %v460 = vld [vmem:[%s458 + $0x8] sm:$0xff]
    %v461 = vmul.f32 %v436, %v459
    %v462 = vmul.f32 %v437, %v460
    %v463 = vadd.f32 %v442, %v461
    %v464 = vadd.f32 %v443, %v462
    %v465 = vrot.slane %v436, 1
    %v466 = vrot.slane %v437, 1
    %s467 = scalar_lea.vmem [#allocation13], 64
    %v468 = vld [vmem:[%s467] sm:$0xff]
    %v469 = vld [vmem:[%s467 + $0x8] sm:$0xff]
    %v470 = vmul.f32 %v465, %v468
    %v471 = vmul.f32 %v466, %v469
    %v472 = vadd.f32 %v449, %v470
    %v473 = vadd.f32 %v450, %v471
    %v474 = vrot.slane %v436, 2
    %v475 = vrot.slane %v437, 2
    %s476 = scalar_lea.vmem [#allocation13], 80
    %v477 = vld [vmem:[%s476] sm:$0xff]
    %v478 = vld [vmem:[%s476 + $0x8] sm:$0xff]
    %v479 = vmul.f32 %v474, %v477
    %v480 = vmul.f32 %v475, %v478
    %v481 = vadd.f32 %v456, %v479
    %v482 = vadd.f32 %v457, %v480
    %v483 = vrot.slane %v436, 3
    %v484 = vrot.slane %v437, 3
    %s485 = scalar_lea.vmem [#allocation13], 96
    %v486 = vld [vmem:[%s485] sm:$0xff]
    %v487 = vld [vmem:[%s485 + $0x8] sm:$0xff]
    %v488 = vmul.f32 %v483, %v486
    %v489 = vmul.f32 %v484, %v487
    %v490 = vadd.f32 %v463, %v488
    %v491 = vadd.f32 %v464, %v489
    %v492 = vadd.f32 %v490, %v472
    %v493 = vadd.f32 %v491, %v473
    %v494 = vadd.f32 %v492, %v481
    %v495 = vadd.f32 %v493, %v482
    %v496 = vld [vmem:[#allocation14] sm:$0xff]
    %v497 = vld [vmem:[#allocation14 + $0x8] sm:$0xff]
    %v498 = vadd.f32 %v494, %v496
    %v499 = vadd.f32 %v495, %v497
    %v500 = vmax.f32 %v498, 0.0
    %v501 = vmax.f32 %v499, 0.0
    %v502 = vadd.f32 %v500, %v134
    %v503 = vadd.f32 %v501, %v135
    %v504 = vmax.f32 %v502, 0.0
    %v505 = vmax.f32 %v503, 0.0
    %506 = vst [vmem:[#allocation16] sm:$0xff] %v504
    %507 = vst [vmem:[#allocation16 + $0x8] sm:$0xff] %v505
    // Predicated region
    $region70: #{tpu_custom_call.1} parent=1 // pred_check
      _
    $region71: #{tpu_custom_call.1} parent=1 // pred_check_branch
      %509 = sbr.rel (0) target = $region73
    $region72: #{tpu_custom_call.1} parent=1 // pred_region
      %s511 = ssub.s32 256, 256
      %512 = vsyncadd [#allocation4], %s511
      %s514 = sshll.u32 [#allocation16], 4
      %s515 = int_to_ptr.vmem [resolvable:$true] %s514
      %517 = dma.vmem_to_hbm [thread:$0]  %s515, 256, %s9, [#allocation4]
    $region73: #{tpu_custom_call.1} parent=1 // pred_fallthru
      _
    // Predicated region
    $region74: #{tpu_custom_call.1} parent=1 // pred_check
      _
    $region75: #{tpu_custom_call.1} parent=1 // pred_check_branch
      %519 = sbr.rel (0) target = $region77
    $region76: #{tpu_custom_call.1} parent=1 // pred_region
      %520 = dma.done [#allocation4], 256
    $region77: #{tpu_custom_call.1} parent=1 // pred_fallthru
      _
    %521 = vsyncpa [#allocation3], 1
    %522 = vsyncpa [#allocation6], 1
    %523 = vsyncpa [#allocation9], 1
    %524 = vsyncpa [#allocation12], 1
    %525 = vsyncpa [#allocation15], 1
    %526 = vsyncpa [#allocation4], 1

</llo_original>
